<compile_context>
chip_gen: v7x
topology: tpu7x:2x2x1
jax: 0.10.0
libtpu: 0.0.40
codegen_flags: <defaults>
</compile_context>

<pallas_src>
import functools

import jax
import jax.numpy as jnp
from jax import lax
from jax.experimental import pallas as pl
from jax.experimental.pallas import tpu as pltpu


def _mmd_tile_kernel(neg_inv_ref, row_ref, col_ref, sq_row_ref, sq_col_ref,
                     out_ref, *, batch_size, n_total, tile, kernel_mul,
                     kernel_num):
    i = pl.program_id(0)
    j = pl.program_id(1)

    # Per-row-tile accumulator is resident across the column ("arbitrary")
    # axis; zero it at the first column step of every row tile.
    @pl.when(j == 0)
    def _():
        out_ref[...] = jnp.zeros_like(out_ref)

    # Symmetry: only the upper triangle of tiles is computed.
    @pl.when(j >= i)
    def _():
        x = row_ref[...]                                   # (tile, D), native dtype
        y = col_ref[...]                                   # (tile, D)

        # Pairwise squared L2 block: ||x||^2 + ||y||^2 - 2 x.y.  Gram contracts
        # the last dims of both operands (no materialized transpose).
        gram = lax.dot_general(x, y, (((1,), (1,)), ((), ())),
                               preferred_element_type=jnp.float32)  # (tile, tile)
        l2 = jnp.maximum(sq_row_ref[...] + sq_col_ref[...] - 2.0 * gram, 0.0)

        if float(kernel_mul) == 2.0:
            # One EUP exp for the widest bandwidth; narrower bandwidths via
            # repeated squaring on the VPU.
            e = jnp.exp(l2 * neg_inv_ref[kernel_num - 1])
            ksum = e
            for _ in range(kernel_num - 1):
                e = e * e
                ksum = ksum + e
        else:
            ksum = jnp.zeros_like(l2)
            for t in range(kernel_num):
                ksum = ksum + jnp.exp(l2 * neg_inv_ref[t])

        # Quadrant signs (+1 source, -1 target, 0 padding) folded into MXU
        # mat-vecs, so the (tile,tile)->scalar reduce never touches XLU.
        row_ids = i * tile + lax.broadcasted_iota(jnp.int32, (tile, 1), 0)
        col_ids = j * tile + lax.broadcasted_iota(jnp.int32, (tile, 1), 0)
        s_row = jnp.where(row_ids < batch_size, 1.0,
                          jnp.where(row_ids < n_total, -1.0, 0.0))   # (tile, 1)
        s_col = jnp.where(col_ids < batch_size, 1.0,
                          jnp.where(col_ids < n_total, -1.0, 0.0))   # (tile, 1)

        col_sum = jnp.dot(ksum, s_col,
                          preferred_element_type=jnp.float32)        # (tile, 1)
        partial = lax.dot_general(s_row, col_sum, (((0,), (0,)), ((), ())),
                                  preferred_element_type=jnp.float32)  # (1, 1)

        weight = jnp.where(j == i, 1.0, 2.0)   # off-diagonal tiles count twice
        out_ref[...] += weight * partial       # broadcast into (1, 8, 128) block


def _choose_tiling(n2, max_tile):
    """Return (tile, padded_n, n_tiles).

    Small problems use one full-extent block (always legal).  Larger problems
    pad 2B up to a multiple of 128 and use a lane-dense multiple-of-128 tile.
    """
    if n2 <= max_tile:
        return n2, n2, 1
    n_pad = ((n2 + 127) // 128) * 128
    tile = 128
    t = (max_tile // 128) * 128
    while t >= 128:
        if n_pad % t == 0:
            tile = t
            break
        t -= 128
    return tile, n_pad, n_pad // tile


def mmd_loss(source, target, kernel_mul=2.0, kernel_num=5, fix_sigma=None,
             max_tile=512):
    """Pallas TPU implementation of MMD_loss.forward(source, target)."""
    assert source.ndim == 2 and source.shape == target.shape
    assert kernel_num >= 1
    batch, feat = source.shape
    n2 = 2 * batch

    total = jnp.concatenate([source, target], axis=0)      # keep native dtype

    # Per-row squared norms and analytic bandwidth, in f32.  Centered form:
    #   sum_{i,j} ||x_i - x_j||^2 = 2 * n * sum_i ||x_i - mean||^2
    total_f32 = total.astype(jnp.float32)
    sq = jnp.sum(total_f32 * total_f32, axis=-1)            # (n2,)
    if fix_sigma is not None:
        bandwidth = jnp.float32(fix_sigma)
    else:
        centered = total_f32 - jnp.mean(total_f32, axis=0, keepdims=True)
        l2_sum = 2.0 * float(n2) * jnp.sum(centered * centered)
        bandwidth = l2_sum / float(n2 * n2 - n2)
    bandwidth = bandwidth / (float(kernel_mul) ** (kernel_num // 2))
    # Hoisted scalar factors: neg_inv[t] = -1 / (bandwidth * kernel_mul**t)
    muls = float(kernel_mul) ** jnp.arange(kernel_num, dtype=jnp.float32)
    neg_inv = (-1.0 / (bandwidth * muls)).astype(jnp.float32)

    tile, n_pad, n_tiles = _choose_tiling(n2, max_tile)
    if n_pad > n2:
        pad = n_pad - n2
        total = jnp.pad(total, ((0, pad), (0, 0)))
        sq = jnp.pad(sq, (0, pad))
    sq_row = sq.reshape(n_pad, 1)
    sq_col = sq.reshape(1, n_pad)

    kernel = functools.partial(
        _mmd_tile_kernel,
        batch_size=batch,
        n_total=n2,
        tile=tile,
        kernel_mul=float(kernel_mul),
        kernel_num=int(kernel_num),
    )

    out = pl.pallas_call(
        kernel,
        grid=(n_tiles, n_tiles),
        in_specs=[
            pl.BlockSpec(memory_space=pltpu.MemorySpace.SMEM),     # neg_inv
            pl.BlockSpec((tile, feat), lambda i, j: (i, 0)),       # row slab
            pl.BlockSpec((tile, feat), lambda i, j: (j, 0)),       # col slab
            pl.BlockSpec((tile, 1), lambda i, j: (i, 0)),          # row ||x||^2
            pl.BlockSpec((1, tile), lambda i, j: (0, j)),          # col ||x||^2
        ],
        out_specs=pl.BlockSpec((1, 8, 128), lambda i, j: (i, 0, 0)),
        out_shape=jax.ShapeDtypeStruct((n_tiles, 8, 128), jnp.float32),
        compiler_params=pltpu.CompilerParams(
            dimension_semantics=("parallel", "arbitrary"),
            vmem_limit_bytes=32 * 1024 * 1024,
        ),
    )(neg_inv, total, total, sq_row, sq_col)

    return jnp.sum(out[:, 0, 0]) / float(batch * batch)


def _mmd_loss_ref(source, target, kernel_mul=2.0, kernel_num=5):
    """Pure-JAX reference mirroring the PyTorch code (sanity check)."""
    b = source.shape[0]
    total = jnp.concatenate([source, target], axis=0).astype(jnp.float32)
    n = total.shape[0]
    diff = total[None, :, :] - total[:, None, :]
    l2 = jnp.sum(diff * diff, axis=2)
    bandwidth = jnp.sum(l2) / (n * n - n)
    bandwidth = bandwidth / (kernel_mul ** (kernel_num // 2))
    kernels = sum(jnp.exp(-l2 / (bandwidth * kernel_mul ** i))
                  for i in range(kernel_num))
    xx = kernels[:b, :b]
    yy = kernels[b:, b:]
    xy = kernels[:b, b:]
    yx = kernels[b:, :b]
    return jnp.mean(xx + yy - xy - yx)


if __name__ == "__main__":
    key = jax.random.PRNGKey(0)
    k1, k2 = jax.random.split(key)
    batch, hidden = 8, 32
    source = jax.random.normal(k1, (batch, hidden), dtype=jnp.float32)
    target = jax.random.normal(k2, (batch, hidden), dtype=jnp.float32) + 0.5

    loss = jax.block_until_ready(mmd_loss(source, target))
    ref = jax.block_until_ready(_mmd_loss_ref(source, target))

    assert jnp.isfinite(loss), "non-finite loss"
    assert jnp.allclose(loss, ref, rtol=1e-4, atol=1e-4), (loss, ref)
    print("KERNEL_OK")
</pallas_src>

<mosaic_0001>
module attributes {stable_mosaic.version = 11 : i64} {
  func.func @_mmd_tile_kernel(%arg0: i32, %arg1: i32, %arg2: memref<5xf32, #tpu.memory_space<smem>>, %arg3: memref<16x32xf32, #tpu.memory_space<vmem>>, %arg4: memref<16x32xf32, #tpu.memory_space<vmem>>, %arg5: memref<16x1xf32, #tpu.memory_space<vmem>>, %arg6: memref<1x16xf32, #tpu.memory_space<vmem>>, %arg7: memref<1x8x128xf32, #tpu.memory_space<vmem>>) attributes {dimension_semantics = [#tpu.dimension_semantics<parallel>, #tpu.dimension_semantics<arbitrary>], iteration_bounds = array<i64: 1, 1>, scalar_prefetch = 0 : i64, scratch_operands = 0 : i64, tpu.core_type = #tpu.core_type<tc>, window_params = [{transform_indices = @transform_0, window_bounds = array<i64: 5>}, {transform_indices = @transform_1, window_bounds = array<i64: 16, 32>}, {transform_indices = @transform_2, window_bounds = array<i64: 16, 32>}, {transform_indices = @transform_3, window_bounds = array<i64: 16, 1>}, {transform_indices = @transform_4, window_bounds = array<i64: 1, 16>}, {transform_indices = @transform_5, window_bounds = array<i64: 1, 8, 128>}]} {
    %c0_i32 = arith.constant 0 : i32
    %0 = arith.cmpi eq, %arg1, %c0_i32 : i32
    %1 = arith.extui %0 : i1 to i32
    %c0_i32_0 = arith.constant 0 : i32
    %2 = arith.cmpi ne, %1, %c0_i32_0 : i32
    scf.if %2 {
      %cst = arith.constant 0.000000e+00 : f32
      %6 = vector.broadcast %cst : f32 to vector<1x8x128xf32>
      %c0 = arith.constant 0 : index
      %c0_2 = arith.constant 0 : index
      %c0_3 = arith.constant 0 : index
      %7 = vector.load %arg7[%c0, %c0_2, %c0_3] : memref<1x8x128xf32, #tpu.memory_space<vmem>>, vector<1x8x128xf32>
      tpu.vector_store %arg7[%c0, %c0_2, %c0_3], %6 {strides = array<i32>} : memref<1x8x128xf32, #tpu.memory_space<vmem>>, vector<1x8x128xf32>,
    } else {
    }
    %3 = arith.cmpi sge, %arg1, %arg0 : i32
    %4 = arith.extui %3 : i1 to i32
    %c0_i32_1 = arith.constant 0 : i32
    %5 = arith.cmpi ne, %4, %c0_i32_1 : i32
    scf.if %5 {
      %c0 = arith.constant 0 : index
      %c0_2 = arith.constant 0 : index
      %6 = vector.load %arg3[%c0, %c0_2] : memref<16x32xf32, #tpu.memory_space<vmem>>, vector<16x32xf32>
      %c0_3 = arith.constant 0 : index
      %c0_4 = arith.constant 0 : index
      %7 = vector.load %arg4[%c0_3, %c0_4] : memref<16x32xf32, #tpu.memory_space<vmem>>, vector<16x32xf32>
      %cst = arith.constant dense<0.000000e+00> : vector<16x16xf32>
      %8 = tpu.matmul %6, %7, %cst {dimension_numbers = #tpu.dot_dimension_numbers<[1], [1], [0], [0], [0, 0, 1, 0], [], []>} : vector<16x32xf32>, vector<16x32xf32>, vector<16x16xf32> -> vector<16x16xf32>
      %c0_5 = arith.constant 0 : index
      %c0_6 = arith.constant 0 : index
      %9 = vector.load %arg5[%c0_5, %c0_6] : memref<16x1xf32, #tpu.memory_space<vmem>>, vector<16x1xf32>
      %c0_7 = arith.constant 0 : index
      %c0_8 = arith.constant 0 : index
      %10 = vector.load %arg6[%c0_7, %c0_8] : memref<1x16xf32, #tpu.memory_space<vmem>>, vector<1x16xf32>
      %11 = vector.broadcast %9 : vector<16x1xf32> to vector<16x16xf32>
      %12 = vector.broadcast %10 : vector<1x16xf32> to vector<16x16xf32>
      %13 = arith.addf %11, %12 : vector<16x16xf32>
      %cst_9 = arith.constant 2.000000e+00 : f32
      %14 = vector.broadcast %cst_9 : f32 to vector<16x16xf32>
      %15 = arith.mulf %14, %8 : vector<16x16xf32>
      %16 = arith.subf %13, %15 : vector<16x16xf32>
      %cst_10 = arith.constant 0.000000e+00 : f32
      %17 = vector.broadcast %cst_10 : f32 to vector<16x16xf32>
      %18 = arith.maximumf %16, %17 : vector<16x16xf32>
      %c4 = arith.constant 4 : index
      %19 = memref.load %arg2[%c4] : memref<5xf32, #tpu.memory_space<smem>>
      %20 = vector.broadcast %19 : f32 to vector<16x16xf32>
      %21 = arith.mulf %18, %20 : vector<16x16xf32>
      %22 = math.exp %21 : vector<16x16xf32>
      %23 = arith.mulf %22, %22 : vector<16x16xf32>
      %24 = arith.addf %22, %23 : vector<16x16xf32>
      %25 = arith.mulf %23, %23 : vector<16x16xf32>
      %26 = arith.addf %24, %25 : vector<16x16xf32>
      %27 = arith.mulf %25, %25 : vector<16x16xf32>
      %28 = arith.addf %26, %27 : vector<16x16xf32>
      %29 = arith.mulf %27, %27 : vector<16x16xf32>
      %30 = arith.addf %28, %29 : vector<16x16xf32>
      %c16_i32 = arith.constant 16 : i32
      %31 = arith.muli %arg0, %c16_i32 : i32
      %32 = tpu.iota {dimensions = array<i32: 0>} : vector<16x1xi32>
      %33 = vector.broadcast %31 : i32 to vector<16x1xi32>
      %34 = arith.addi %33, %32 : vector<16x1xi32>
      %c16_i32_11 = arith.constant 16 : i32
      %35 = arith.muli %arg1, %c16_i32_11 : i32
      %36 = tpu.iota {dimensions = array<i32: 0>} : vector<16x1xi32>
      %37 = vector.broadcast %35 : i32 to vector<16x1xi32>
      %38 = arith.addi %37, %36 : vector<16x1xi32>
      %c8_i32 = arith.constant 8 : i32
      %39 = vector.broadcast %c8_i32 : i32 to vector<16x1xi32>
      %40 = arith.cmpi slt, %34, %39 : vector<16x1xi32>
      %c16_i32_12 = arith.constant 16 : i32
      %41 = vector.broadcast %c16_i32_12 : i32 to vector<16x1xi32>
      %42 = arith.cmpi slt, %34, %41 : vector<16x1xi32>
      %cst_13 = arith.constant -1.000000e+00 : f32
      %cst_14 = arith.constant 0.000000e+00 : f32
      %43 = vector.broadcast %cst_13 : f32 to vector<16x1xf32>
      %44 = vector.broadcast %cst_14 : f32 to vector<16x1xf32>
      %45 = arith.select %42, %43, %44 : vector<16x1xi1>, vector<16x1xf32>
      %cst_15 = arith.constant 1.000000e+00 : f32
      %46 = vector.broadcast %cst_15 : f32 to vector<16x1xf32>
      %47 = arith.select %40, %46, %45 : vector<16x1xi1>, vector<16x1xf32>
      %c8_i32_16 = arith.constant 8 : i32
      %48 = vector.broadcast %c8_i32_16 : i32 to vector<16x1xi32>
      %49 = arith.cmpi slt, %38, %48 : vector<16x1xi32>
      %c16_i32_17 = arith.constant 16 : i32
      %50 = vector.broadcast %c16_i32_17 : i32 to vector<16x1xi32>
      %51 = arith.cmpi slt, %38, %50 : vector<16x1xi32>
      %cst_18 = arith.constant -1.000000e+00 : f32
      %cst_19 = arith.constant 0.000000e+00 : f32
      %52 = vector.broadcast %cst_18 : f32 to vector<16x1xf32>
      %53 = vector.broadcast %cst_19 : f32 to vector<16x1xf32>
      %54 = arith.select %51, %52, %53 : vector<16x1xi1>, vector<16x1xf32>
      %cst_20 = arith.constant 1.000000e+00 : f32
      %55 = vector.broadcast %cst_20 : f32 to vector<16x1xf32>
      %56 = arith.select %49, %55, %54 : vector<16x1xi1>, vector<16x1xf32>
      %cst_21 = arith.constant dense<0.000000e+00> : vector<16x1xf32>
      %57 = tpu.matmul %30, %56, %cst_21 {dimension_numbers = #tpu.dot_dimension_numbers<[1], [0], [0], [1], [0, 0, 1, 1], [], []>} : vector<16x16xf32>, vector<16x1xf32>, vector<16x1xf32> -> vector<16x1xf32>
      %cst_22 = arith.constant dense<0.000000e+00> : vector<1x1xf32>
      %58 = tpu.matmul %47, %57, %cst_22 {dimension_numbers = #tpu.dot_dimension_numbers<[0], [0], [1], [1], [0, 1, 1, 1], [], []>} : vector<16x1xf32>, vector<16x1xf32>, vector<1x1xf32> -> vector<1x1xf32>
      %59 = arith.cmpi eq, %arg1, %arg0 : i32
      %cst_23 = arith.constant 1.000000e+00 : f32
      %cst_24 = arith.constant 2.000000e+00 : f32
      %60 = arith.select %59, %cst_23, %cst_24 : f32
      %c0_25 = arith.constant 0 : index
      %c0_26 = arith.constant 0 : index
      %c0_27 = arith.constant 0 : index
      %61 = vector.load %arg7[%c0_25, %c0_26, %c0_27] : memref<1x8x128xf32, #tpu.memory_space<vmem>>, vector<1x8x128xf32>
      %62 = vector.broadcast %60 : f32 to vector<1x1xf32>
      %63 = arith.mulf %62, %58 : vector<1x1xf32>
      %64 = vector.shape_cast %63 : vector<1x1xf32> to vector<1x1x1xf32>
      %65 = vector.broadcast %64 : vector<1x1x1xf32> to vector<1x8x128xf32>
      %66 = arith.addf %61, %65 : vector<1x8x128xf32>
      %c0_28 = arith.constant 0 : index
      %c0_29 = arith.constant 0 : index
      %c0_30 = arith.constant 0 : index
      %67 = vector.load %arg7[%c0_28, %c0_29, %c0_30] : memref<1x8x128xf32, #tpu.memory_space<vmem>>, vector<1x8x128xf32>
      tpu.vector_store %arg7[%c0_28, %c0_29, %c0_30], %66 {strides = array<i32>} : memref<1x8x128xf32, #tpu.memory_space<vmem>>, vector<1x8x128xf32>,
    } else {
    }
    return
  }
  func.func @transform_0(%arg0: i32, %arg1: i32) -> i32 {
    %c0_i32 = arith.constant 0 : i32
    %c0_i32_0 = arith.constant 0 : i32
    return %c0_i32 : i32
  }
  func.func @transform_1(%arg0: i32, %arg1: i32) -> (i32, i32) {
    %c0_i32 = arith.constant 0 : i32
    %c0_i32_0 = arith.constant 0 : i32
    return %arg0, %c0_i32 : i32, i32
  }
  func.func @transform_2(%arg0: i32, %arg1: i32) -> (i32, i32) {
    %c0_i32 = arith.constant 0 : i32
    %c0_i32_0 = arith.constant 0 : i32
    return %arg1, %c0_i32 : i32, i32
  }
  func.func @transform_3(%arg0: i32, %arg1: i32) -> (i32, i32) {
    %c0_i32 = arith.constant 0 : i32
    %c0_i32_0 = arith.constant 0 : i32
    return %arg0, %c0_i32 : i32, i32
  }
  func.func @transform_4(%arg0: i32, %arg1: i32) -> (i32, i32) {
    %c0_i32 = arith.constant 0 : i32
    %c0_i32_0 = arith.constant 0 : i32
    return %c0_i32, %arg1 : i32, i32
  }
  func.func @transform_5(%arg0: i32, %arg1: i32) -> (i32, i32, i32) {
    %c0_i32 = arith.constant 0 : i32
    %c0_i32_0 = arith.constant 0 : i32
    %c0_i32_1 = arith.constant 0 : i32
    return %arg0, %c0_i32, %c0_i32_0 : i32, i32, i32
  }
}

</mosaic_0001>

<llo_original>
// kernel: tpu_custom_call.1
$region0: #{tpu_custom_call.1}
  #allocation0 [shape = 'u32[]', space=smem, size = 0x4, offset = 0x4, fixed_abs, tag = 'smem constant byte address 0x4 - core index']
  #allocation1 [shape = 'u32[144,128]{1,0:T(1,128)}', space=vmem, size = 0x12000, scoped, tag = 'internal scratch']
  %s0 = inlined_call_operand.vmem [shape: f32[5], index: 0, kind: input, shape index: {}]
  %s1 = inlined_call_operand.vmem [shape: f32[16,32], index: 1, kind: input, shape index: {}]
  %s2 = inlined_call_operand.hbm [shape: f32[16,32], index: 2, kind: input, shape index: {}]
  %s3 = inlined_call_operand.vmem [shape: f32[16,1], index: 3, kind: input, shape index: {}]
  %s4 = inlined_call_operand.vmem [shape: f32[1,16], index: 4, kind: input, shape index: {}]
  %s5 = inlined_call_operand.hbm [shape: f32[1,8,128], index: 5, kind: output, shape index: {}]
  %s6 = sld [smem:[#allocation0]]
  $region46: #{tpu_custom_call.1} parent=0
    _
  %s8 = ssub.s32 1, %s6
  %s9 = scalar_select 0, %s8, %s6
  $region1: #{tpu_custom_call.1} parent=0
    #allocation2 [shape = 'u8[512]{0}', space=smem, size = 0x200, scoped, tag = 'input window, operand 0, single buffered']
    #allocation3 [shape = 's32[1]{0}', space=sflag, size = 0x4, scoped, tag = 'scoped memory for tpu_custom_call.1']
    #allocation4 [shape = 's32[1]{0}', space=sflag, size = 0x4, scoped, tag = 'scoped memory for tpu_custom_call.1']
    #allocation5 [shape = 's32[1]{0}', space=sflag, size = 0x4, scoped, tag = 'scoped memory for tpu_custom_call.1']
    #allocation6 [shape = 'u8[8192]{0}', space=vmem, size = 0x2000, scoped, tag = 'input window, operand 2, single buffered']
    #allocation7 [shape = 'u8[4096]{0}', space=vmem, size = 0x1000, scoped, tag = 'output window, operand 0, single buffered']
    %10 = vsyncpa [#allocation5], 0
    %11 = vsyncpa [#allocation3], 0
    %12 = vsyncpa [#allocation4], 0
    // Predicated region
    $region2: #{tpu_custom_call.1} parent=1 // pred_check
      _
    $region3: #{tpu_custom_call.1} parent=1 // pred_check_branch
      %14 = sbr.rel (0) target = $region5
    $region4: #{tpu_custom_call.1} parent=1 // pred_region
      %s16 = ssub.s32 16, 16
      %17 = vsyncadd [#allocation5], %s16
      %s19 = sshll.u32 %s0, 4
      %s20 = int_to_ptr.vmem [resolvable:$true] %s19
      %22 = dma.vmem_to_smem %s20, 16, [#allocation2], [#allocation5]
    $region5: #{tpu_custom_call.1} parent=1 // pred_fallthru
      _
    // Predicated region
    $region6: #{tpu_custom_call.1} parent=1 // pred_check
      _
    $region7: #{tpu_custom_call.1} parent=1 // pred_check_branch
      %24 = sbr.rel (0) target = $region9
    $region8: #{tpu_custom_call.1} parent=1 // pred_region
      _
    $region9: #{tpu_custom_call.1} parent=1 // pred_fallthru
      _
    // Predicated region
    $region10: #{tpu_custom_call.1} parent=1 // pred_check
      _
    $region11: #{tpu_custom_call.1} parent=1 // pred_check_branch
      %26 = sbr.rel (0) target = $region13
    $region12: #{tpu_custom_call.1} parent=1 // pred_region
      %s28 = ssub.s32 256, 256
      %29 = vsyncadd [#allocation3], %s28
      %s30 = sshll.u32 [#allocation6], 4
      %s31 = int_to_ptr.vmem [resolvable:$true] %s30
      %36 = dma.hbm_to_vmem [thread:$0]  %s2, 256, %s31, [#allocation3], 128, 128, 8
    $region13: #{tpu_custom_call.1} parent=1 // pred_fallthru
      _
    // Predicated region
    $region14: #{tpu_custom_call.1} parent=1 // pred_check
      _
    $region15: #{tpu_custom_call.1} parent=1 // pred_check_branch
      %38 = sbr.rel (0) target = $region17
    $region16: #{tpu_custom_call.1} parent=1 // pred_region
      _
    $region17: #{tpu_custom_call.1} parent=1 // pred_fallthru
      _
    // Predicated region
    $region18: #{tpu_custom_call.1} parent=1 // pred_check
      _
    $region19: #{tpu_custom_call.1} parent=1 // pred_check_branch
      %40 = sbr.rel (0) target = $region21
    $region20: #{tpu_custom_call.1} parent=1 // pred_region
      _
    $region21: #{tpu_custom_call.1} parent=1 // pred_fallthru
      _
    // Predicated region
    $region22: #{tpu_custom_call.1} parent=1 // pred_check
      _
    $region23: #{tpu_custom_call.1} parent=1 // pred_check_branch
      %42 = sbr.rel (0) target = $region25
    $region24: #{tpu_custom_call.1} parent=1 // pred_region
      %43 = dma.done [#allocation5], 16
    $region25: #{tpu_custom_call.1} parent=1 // pred_fallthru
      _
    // Predicated region
    $region26: #{tpu_custom_call.1} parent=1 // pred_check
      _
    $region27: #{tpu_custom_call.1} parent=1 // pred_check_branch
      %45 = sbr.rel (0) target = $region29
    $region28: #{tpu_custom_call.1} parent=1 // pred_region
      %46 = dma.done [#allocation3], 256
    $region29: #{tpu_custom_call.1} parent=1 // pred_fallthru
      _
    %47 = sfence
    %p48 = scmp.eq.s32.totalorder 0, 0
    // Predicated region
    $region30: #{tpu_custom_call.1} parent=1 // pred_check
      %p49 = pneg %p48
    $region31: #{tpu_custom_call.1} parent=1 // pred_check_branch
      %51 = sbr.rel (%p49) target = $region33
    $region32: #{tpu_custom_call.1} parent=1 // pred_region
      %52 = vst [vmem:[#allocation7] sm:$0xff] 0.0
    $region33: #{tpu_custom_call.1} parent=1 // pred_fallthru
      _
    %p53 = scmp.ge.s32.totalorder 0, 0
    // Predicated region
    $region34: #{tpu_custom_call.1} parent=1 // pred_check
      %p54 = pneg %p53
    $region35: #{tpu_custom_call.1} parent=1 // pred_check_branch
      %56 = sbr.rel (%p54) target = $region37
    $region36: #{tpu_custom_call.1} parent=1 // pred_region
      %v57 = vld [vmem:[%s1] sm:$0xff]
      %v58 = vld [vmem:[%s1 + $0x8] sm:$0xff]
      %v59 = vld [vmem:[#allocation6] sm:$0xff]
      %v60 = vld [vmem:[#allocation6 + $0x8] sm:$0xff]
      %vm61 = vcmask 261120
      %v63 = vsel %vm61, %v57, 0
      %v66 = vsel %vm61, %v58, 0
      %v69 = vsel %vm61, %v59, 0
      %v72 = vsel %vm61, %v60, 0
      %74 = vmatprep.subr.mxu0 0.0
      %75 = vmatpush1.xpose.msra.mxu0 %v69
      %76 = vmatprep.subr.mxu0 0.0
      %77 = vmatpush1.xpose.msra.mxu0 %v72
      %78 = vmatprep.subr.mxu0 0.0
      %79 = vmatpush1.xpose.msra.mxu0 0.0
      %80 = vmatprep.subr.mxu0 0.0
      %81 = vmatpush1.xpose.msra.mxu0 0.0
      %82 = vmatprep.subr.mxu0 0.0
      %83 = vmatpush1.xpose.msra.mxu0 0.0
      %84 = vmatprep.subr.mxu0 0.0
      %85 = vmatpush1.xpose.msra.mxu0 0.0
      %86 = vmatprep.subr.mxu0 0.0
      %87 = vmatpush1.xpose.msra.mxu0 0.0
      %88 = vmatprep.subr.mxu0 0.0
      %89 = vmatpush1.xpose.msra.mxu0 0.0
      %90 = vmatprep.subr.mxu0 0.0
      %91 = vmatpush1.xpose.msra.mxu0 0.0
      %92 = vmatprep.subr.mxu0 0.0
      %93 = vmatpush1.xpose.msra.mxu0 0.0
      %94 = vmatprep.subr.mxu0 0.0
      %95 = vmatpush1.xpose.msra.mxu0 0.0
      %96 = vmatprep.subr.mxu0 0.0
      %97 = vmatpush1.xpose.msra.mxu0 0.0
      %98 = vmatprep.subr.mxu0 0.0
      %99 = vmatpush1.xpose.msra.mxu0 0.0
      %100 = vmatprep.subr.mxu0 0.0
      %101 = vmatpush1.xpose.msra.mxu0 0.0
      %102 = vmatprep.subr.mxu0 0.0
      %103 = vmatpush1.xpose.msra.mxu0 0.0
      %104 = vmatprep.subr.mxu0 0.0
      %105 = vmatpush1.xpose.msra.mxu0 0.0
      %106 = vmatprep.subr.mxu0 0.0
      %107 = vmatpush1.xpose.msra.mxu0 0.0
      %108 = vmatprep.subr.mxu0 0.0
      %109 = vmatpush1.xpose.msra.mxu0 0.0
      %110 = vmatprep.subr.mxu0 0.0
      %111 = vmatpush1.xpose.msra.mxu0 0.0
      %112 = vmatprep.subr.mxu0 0.0
      %113 = vmatpush1.xpose.msra.mxu0 0.0
      %114 = vmatprep.subr.mxu0 0.0
      %115 = vmatpush1.xpose.msra.mxu0 0.0
      %116 = vmatprep.subr.mxu0 0.0
      %117 = vmatpush1.xpose.msra.mxu0 0.0
      %118 = vmatprep.subr.mxu0 0.0
      %119 = vmatpush1.xpose.msra.mxu0 0.0
      %120 = vmatprep.subr.mxu0 0.0
      %121 = vmatpush1.xpose.msra.mxu0 0.0
      %122 = vmatprep.subr.mxu0 0.0
      %123 = vmatpush1.xpose.msra.mxu0 0.0
      %124 = vmatprep.subr.mxu0 0.0
      %125 = vmatpush1.xpose.msra.mxu0 0.0
      %126 = vmatprep.subr.mxu0 0.0
      %127 = vmatpush1.xpose.msra.mxu0 0.0
      %128 = vmatprep.subr.mxu0 0.0
      %129 = vmatpush1.xpose.msra.mxu0 0.0
      %130 = vmatprep.subr.mxu0 0.0
      %131 = vmatpush1.xpose.msra.mxu0 0.0
      %132 = vmatprep.subr.mxu0 0.0
      %133 = vmatpush1.xpose.msra.mxu0 0.0
      %134 = vmatprep.subr.mxu0 0.0
      %135 = vmatpush1.xpose.msra.mxu0 0.0
      %136 = vmatprep.subr.mxu0 0.0
      %137 = vmatpush1.xpose.msra.mxu0 0.0
      %138 = vmatprep.mubr.f32.mxu0 0.0
      %139 = vmatmul.mubr.f32.gmra.mrb[0].mxu0 %v63
      %v140 = vpop.f32.mrb[0].mxu0
      %v141 = vadd.f32 0.0, %v140
      %v142 = vpop.f32.mrb[0].mxu0
      %143 = vmatprep.mubr.f32.mxu0 0.0
      %144 = vmatmul.mubr.f32.gmra.mrb[0].mxu0 %v66
      %v145 = vpop.f32.mrb[0].mxu0
      %v146 = vadd.f32 0.0, %v145
      %v147 = vpop.f32.mrb[0].mxu0
      %148 = vdwg.mxu0
      %v149 = vld [vmem:[%s3] sm:$0xff]
      %v150 = vld [vmem:[%s3 + $0x8] sm:$0xff]
      %v151 = vld [vmem:[%s4] sm:$0x1]
      %153 = vset.pattern.permute.xlu0 0
      %154 = vperm.xlu0 %153, %v149
      %v155 = vpop.permute.xlu0 %154
      %158 = vset.pattern.permute.xlu0 0
      %159 = vperm.xlu0 %158, %v150
      %v160 = vpop.permute.xlu0 %159
      %v163 = vlaneseq
      %v164 = vshrl.u32 %v163, 7
      %v165 = vsub.s32 0, %v164
      %v166 = vrot.slane %v151, %v165
      %v168 = vadd.f32 %v155, %v166
      %v169 = vadd.f32 %v160, %v166
      %v170 = vmul.f32 %v141, 2.0
      %v171 = vmul.f32 %v146, 2.0
      %v172 = vsub.f32 %v168, %v170
      %v173 = vsub.f32 %v169, %v171
      %v174 = vmax.f32 %v172, 0.0
      %v175 = vmax.f32 %v173, 0.0
      %s176 = sld [smem:[#allocation2 + $0x4]]
      %v177 = vstv %s176
      %v178 = vmul.f32 %v174, %v177
      %v179 = vmul.f32 %v175, %v177
      %v180 = vmul.f32 %v178, 1.442695
      %v181 = vpow.pop %v180
      %v182 = vmul.f32 %v179, 1.442695
      %v183 = vpow.pop %v182
      %v184 = vmul.f32 %v181, %v181
      %v185 = vmul.f32 %v183, %v183
      %v186 = vadd.f32 %v181, %v184
      %v187 = vadd.f32 %v183, %v185
      %v188 = vmul.f32 %v184, %v184
      %v189 = vmul.f32 %v185, %v185
      %v190 = vadd.f32 %v186, %v188
      %v191 = vadd.f32 %v187, %v189
      %v192 = vmul.f32 %v188, %v188
      %v193 = vmul.f32 %v189, %v189
      %v194 = vadd.f32 %v190, %v192
      %v195 = vadd.f32 %v191, %v193
      %v196 = vmul.f32 %v192, %v192
      %v197 = vmul.f32 %v193, %v193
      %v198 = vadd.f32 %v194, %v196
      %v199 = vadd.f32 %v195, %v197
      %s200 = smul.u32 0, 16
      %v201 = vlaneseq
      %v202 = vshrl.u32 %v201, 7
      %v203 = vadd.s32 %v202, 8
      %v204 = vstv %s200
      %v205 = vadd.s32 %v204, %v202
      %v206 = vadd.s32 %v204, %v203
      %s207 = smul.u32 0, 16
      %v208 = vstv %s207
      %v209 = vadd.s32 %v208, %v202
      %v210 = vadd.s32 %v208, %v203
      %vm211 = vcmp.lt.s32.totalorder %v205, 8
      %vm212 = vcmp.lt.s32.totalorder %v206, 8
      %vm213 = vcmp.lt.s32.totalorder %v205, 16
      %vm214 = vcmp.lt.s32.totalorder %v206, 16
      %v215 = vsel %vm213, -1.0, 0.0
      %v216 = vsel %vm214, -1.0, 0.0
      %v217 = vsel %vm211, 1.0, %v215
      %v218 = vsel %vm212, 1.0, %v216
      %vm219 = vcmp.lt.s32.totalorder %v209, 8
      %vm220 = vcmp.lt.s32.totalorder %v210, 8
      %vm221 = vcmp.lt.s32.totalorder %v209, 16
      %vm222 = vcmp.lt.s32.totalorder %v210, 16
      %v223 = vsel %vm221, -1.0, 0.0
      %v224 = vsel %vm222, -1.0, 0.0
      %v225 = vsel %vm219, 1.0, %v223
      %v226 = vsel %vm220, 1.0, %v224
      %vm227 = vcmask 130048
      %v229 = vsel %vm227, %v198, 0
      %v232 = vsel %vm227, %v199, 0
      %234 = vmatprep.subr.mxu0 0.0
      %235 = vmatpush1.msra.mxu0 %v225
      %236 = vmatprep.subr.mxu0 0.0
      %237 = vmatpush1.msra.mxu0 %v226
      %238 = vmatprep.subr.mxu0 0.0
      %239 = vmatpush1.msra.mxu0 0.0
      %240 = vmatprep.subr.mxu0 0.0
      %241 = vmatpush1.msra.mxu0 0.0
      %242 = vmatprep.subr.mxu0 0.0
      %243 = vmatpush1.msra.mxu0 0.0
      %244 = vmatprep.subr.mxu0 0.0
      %245 = vmatpush1.msra.mxu0 0.0
      %246 = vmatprep.subr.mxu0 0.0
      %247 = vmatpush1.msra.mxu0 0.0
      %248 = vmatprep.subr.mxu0 0.0
      %249 = vmatpush1.msra.mxu0 0.0
      %250 = vmatprep.subr.mxu0 0.0
      %251 = vmatpush1.msra.mxu0 0.0
      %252 = vmatprep.subr.mxu0 0.0
      %253 = vmatpush1.msra.mxu0 0.0
      %254 = vmatprep.subr.mxu0 0.0
      %255 = vmatpush1.msra.mxu0 0.0
      %256 = vmatprep.subr.mxu0 0.0
      %257 = vmatpush1.msra.mxu0 0.0
      %258 = vmatprep.subr.mxu0 0.0
      %259 = vmatpush1.msra.mxu0 0.0
      %260 = vmatprep.subr.mxu0 0.0
      %261 = vmatpush1.msra.mxu0 0.0
      %262 = vmatprep.subr.mxu0 0.0
      %263 = vmatpush1.msra.mxu0 0.0
      %264 = vmatprep.subr.mxu0 0.0
      %265 = vmatpush1.msra.mxu0 0.0
      %266 = vmatprep.subr.mxu0 0.0
      %267 = vmatpush1.msra.mxu0 0.0
      %268 = vmatprep.subr.mxu0 0.0
      %269 = vmatpush1.msra.mxu0 0.0
      %270 = vmatprep.subr.mxu0 0.0
      %271 = vmatpush1.msra.mxu0 0.0
      %272 = vmatprep.subr.mxu0 0.0
      %273 = vmatpush1.msra.mxu0 0.0
      %274 = vmatprep.subr.mxu0 0.0
      %275 = vmatpush1.msra.mxu0 0.0
      %276 = vmatprep.subr.mxu0 0.0
      %277 = vmatpush1.msra.mxu0 0.0
      %278 = vmatprep.subr.mxu0 0.0
      %279 = vmatpush1.msra.mxu0 0.0
      %280 = vmatprep.subr.mxu0 0.0
      %281 = vmatpush1.msra.mxu0 0.0
      %282 = vmatprep.subr.mxu0 0.0
      %283 = vmatpush1.msra.mxu0 0.0
      %284 = vmatprep.subr.mxu0 0.0
      %285 = vmatpush1.msra.mxu0 0.0
      %286 = vmatprep.subr.mxu0 0.0
      %287 = vmatpush1.msra.mxu0 0.0
      %288 = vmatprep.subr.mxu0 0.0
      %289 = vmatpush1.msra.mxu0 0.0
      %290 = vmatprep.subr.mxu0 0.0
      %291 = vmatpush1.msra.mxu0 0.0
      %292 = vmatprep.subr.mxu0 0.0
      %293 = vmatpush1.msra.mxu0 0.0
      %294 = vmatprep.subr.mxu0 0.0
      %295 = vmatpush1.msra.mxu0 0.0
      %296 = vmatprep.subr.mxu0 0.0
      %297 = vmatpush1.msra.mxu0 0.0
      %298 = vmatprep.mubr.f32.mxu0 0.0
      %299 = vmatmul.mubr.f32.gmra.mrb[0].mxu0 %v229
      %v300 = vpop.f32.mrb[0].mxu0
      %v301 = vadd.f32 0.0, %v300
      %v302 = vpop.f32.mrb[0].mxu0
      %303 = vmatprep.mubr.f32.mxu0 0.0
      %304 = vmatmul.mubr.f32.gmra.mrb[0].mxu0 %v232
      %v305 = vpop.f32.mrb[0].mxu0
      %v306 = vadd.f32 0.0, %v305
      %v307 = vpop.f32.mrb[0].mxu0
      %308 = vdwg.mxu0
      %309 = vxpose.xlu0.b32.start [1/16] %v217, 128
      %310 = vxpose.xlu0.b32.cont [2/16] %v218, 128
      %311 = vxpose.xlu0.b32.cont [3/16] 0.0, 128
      %312 = vxpose.xlu0.b32.cont [4/16] 0.0, 128
      %313 = vxpose.xlu0.b32.cont [5/16] 0.0, 128
      %314 = vxpose.xlu0.b32.cont [6/16] 0.0, 128
      %315 = vxpose.xlu0.b32.cont [7/16] 0.0, 128
      %316 = vxpose.xlu0.b32.cont [8/16] 0.0, 128
      %317 = vxpose.xlu0.b32.cont [9/16] 0.0, 128
      %318 = vxpose.xlu0.b32.cont [10/16] 0.0, 128
      %319 = vxpose.xlu0.b32.cont [11/16] 0.0, 128
      %320 = vxpose.xlu0.b32.cont [12/16] 0.0, 128
      %321 = vxpose.xlu0.b32.cont [13/16] 0.0, 128
      %322 = vxpose.xlu0.b32.cont [14/16] 0.0, 128
      %323 = vxpose.xlu0.b32.cont [15/16] 0.0, 128
      %324 = vxpose.xlu0.b32.end [16/16] 0.0, 128
      %v325 = vpop.trf.xlu0
      %v326 = vpop.trf.xlu0
      %v327 = vpop.trf.xlu0
      %v328 = vpop.trf.xlu0
      %v329 = vpop.trf.xlu0
      %v330 = vpop.trf.xlu0
      %v331 = vpop.trf.xlu0
      %v332 = vpop.trf.xlu0
      %v333 = vpop.trf.xlu0
      %v334 = vpop.trf.xlu0
      %v335 = vpop.trf.xlu0
      %v336 = vpop.trf.xlu0
      %v337 = vpop.trf.xlu0
      %v338 = vpop.trf.xlu0
      %v339 = vpop.trf.xlu0
      %v340 = vpop.trf.xlu0
      %v342 = vsel %vm227, %v325, 0
      %344 = vmatprep.subr.mxu0 0.0
      %345 = vmatpush1.msra.mxu0 %v301
      %346 = vmatprep.subr.mxu0 0.0
      %347 = vmatpush1.msra.mxu0 %v306
      %348 = vmatprep.subr.mxu0 0.0
      %349 = vmatpush1.msra.mxu0 0.0
      %350 = vmatprep.subr.mxu0 0.0
      %351 = vmatpush1.msra.mxu0 0.0
      %352 = vmatprep.subr.mxu0 0.0
      %353 = vmatpush1.msra.mxu0 0.0
      %354 = vmatprep.subr.mxu0 0.0
      %355 = vmatpush1.msra.mxu0 0.0
      %356 = vmatprep.subr.mxu0 0.0
      %357 = vmatpush1.msra.mxu0 0.0
      %358 = vmatprep.subr.mxu0 0.0
      %359 = vmatpush1.msra.mxu0 0.0
      %360 = vmatprep.subr.mxu0 0.0
      %361 = vmatpush1.msra.mxu0 0.0
      %362 = vmatprep.subr.mxu0 0.0
      %363 = vmatpush1.msra.mxu0 0.0
      %364 = vmatprep.subr.mxu0 0.0
      %365 = vmatpush1.msra.mxu0 0.0
      %366 = vmatprep.subr.mxu0 0.0
      %367 = vmatpush1.msra.mxu0 0.0
      %368 = vmatprep.subr.mxu0 0.0
      %369 = vmatpush1.msra.mxu0 0.0
      %370 = vmatprep.subr.mxu0 0.0
      %371 = vmatpush1.msra.mxu0 0.0
      %372 = vmatprep.subr.mxu0 0.0
      %373 = vmatpush1.msra.mxu0 0.0
      %374 = vmatprep.subr.mxu0 0.0
      %375 = vmatpush1.msra.mxu0 0.0
      %376 = vmatprep.subr.mxu0 0.0
      %377 = vmatpush1.msra.mxu0 0.0
      %378 = vmatprep.subr.mxu0 0.0
      %379 = vmatpush1.msra.mxu0 0.0
      %380 = vmatprep.subr.mxu0 0.0
      %381 = vmatpush1.msra.mxu0 0.0
      %382 = vmatprep.subr.mxu0 0.0
      %383 = vmatpush1.msra.mxu0 0.0
      %384 = vmatprep.subr.mxu0 0.0
      %385 = vmatpush1.msra.mxu0 0.0
      %386 = vmatprep.subr.mxu0 0.0
      %387 = vmatpush1.msra.mxu0 0.0
      %388 = vmatprep.subr.mxu0 0.0
      %389 = vmatpush1.msra.mxu0 0.0
      %390 = vmatprep.subr.mxu0 0.0
      %391 = vmatpush1.msra.mxu0 0.0
      %392 = vmatprep.subr.mxu0 0.0
      %393 = vmatpush1.msra.mxu0 0.0
      %394 = vmatprep.subr.mxu0 0.0
      %395 = vmatpush1.msra.mxu0 0.0
      %396 = vmatprep.subr.mxu0 0.0
      %397 = vmatpush1.msra.mxu0 0.0
      %398 = vmatprep.subr.mxu0 0.0
      %399 = vmatpush1.msra.mxu0 0.0
      %400 = vmatprep.subr.mxu0 0.0
      %401 = vmatpush1.msra.mxu0 0.0
      %402 = vmatprep.subr.mxu0 0.0
      %403 = vmatpush1.msra.mxu0 0.0
      %404 = vmatprep.subr.mxu0 0.0
      %405 = vmatpush1.msra.mxu0 0.0
      %406 = vmatprep.subr.mxu0 0.0
      %407 = vmatpush1.msra.mxu0 0.0
      %408 = vmatprep.mubr.f32.mxu0 0.0
      %409 = vmatmul.mubr.f32.gmra.mrb[0].mxu0 %v342
      %v410 = vpop.f32.mrb[0].mxu0
      %v411 = vadd.f32 0.0, %v410
      %v412 = vpop.f32.mrb[0].mxu0
      %413 = vdwg.mxu0
      %p414 = scmp.eq.s32.totalorder 0, 0
      %s415 = scalar_select %p414, 1.0, 2.0
      %v416 = vld [vmem:[#allocation7] sm:$0xff]
      %v417 = vstv %s415
      %v418 = vmul.f32 %v417, %v411
      %s420 = vtos %v418
      %v421 = vstv %s420
      %v423 = vadd.f32 %v416, %v421
      %424 = vst [vmem:[#allocation7] sm:$0xff] %v423
    $region37: #{tpu_custom_call.1} parent=1 // pred_fallthru
      _
    // Predicated region
    $region38: #{tpu_custom_call.1} parent=1 // pred_check
      _
    $region39: #{tpu_custom_call.1} parent=1 // pred_check_branch
      %426 = sbr.rel (0) target = $region41
    $region40: #{tpu_custom_call.1} parent=1 // pred_region
      %s428 = ssub.s32 128, 128
      %429 = vsyncadd [#allocation4], %s428
      %s431 = sshll.u32 [#allocation7], 4
      %s432 = int_to_ptr.vmem [resolvable:$true] %s431
      %434 = dma.vmem_to_hbm [thread:$0]  %s432, 128, %s5, [#allocation4]
    $region41: #{tpu_custom_call.1} parent=1 // pred_fallthru
      _
    // Predicated region
    $region42: #{tpu_custom_call.1} parent=1 // pred_check
      _
    $region43: #{tpu_custom_call.1} parent=1 // pred_check_branch
      %436 = sbr.rel (0) target = $region45
    $region44: #{tpu_custom_call.1} parent=1 // pred_region
      %437 = dma.done [#allocation4], 128
    $region45: #{tpu_custom_call.1} parent=1 // pred_fallthru
      _
    %438 = vsyncpa [#allocation3], 1
    %439 = vsyncpa [#allocation4], 1
    %440 = vsyncpa [#allocation5], 1

</llo_original>
